<compile_context>
chip_gen: v6e
topology: v6e:2x2x1
jax: 0.10.0
libtpu: 0.0.40
codegen_flags: <defaults>
</compile_context>

<pallas_src>
import functools
import math

import jax
import jax.numpy as jnp
from jax import lax
from jax.experimental import pallas as pl
from jax.experimental.pallas import tpu as pltpu


# ----------------------------------------------------------------------------
# Kernels
# ----------------------------------------------------------------------------
def _kernel_resident_batch_acc(x_ref, mu_w_ref, sig_w_ref, eps_w_ref, b_ref,
                               o_ref, acc_ref, *, compute_dtype):
    """Batch resident in VMEM; grid = (Q tiles, K tiles); f32 accumulator."""
    k = pl.program_id(1)

    @pl.when(k == 0)
    def _():
        acc_ref[...] = jnp.zeros_like(acc_ref)

    # Noisy-weight tile in its native (tq, tk) = (Q, P) layout.
    w = mu_w_ref[...] + sig_w_ref[...] * eps_w_ref[...]

    # (Bp, tk) x (tq, tk) contracted over the last dim of both -> (Bp, tq).
    acc_ref[...] += lax.dot_general(
        x_ref[...].astype(compute_dtype), w.astype(compute_dtype),
        dimension_numbers=(((1,), (1,)), ((), ())),
        preferred_element_type=jnp.float32)

    @pl.when(k == pl.num_programs(1) - 1)
    def _():
        o_ref[...] = (acc_ref[...] + b_ref[...]).astype(o_ref.dtype)


def _kernel_resident_batch_1k(x_ref, mu_w_ref, sig_w_ref, eps_w_ref, b_ref,
                              o_ref, *, compute_dtype):
    """Single-K fast path: no accumulator scratch, direct write."""
    w = mu_w_ref[...] + sig_w_ref[...] * eps_w_ref[...]
    acc = lax.dot_general(
        x_ref[...].astype(compute_dtype), w.astype(compute_dtype),
        dimension_numbers=(((1,), (1,)), ((), ())),
        preferred_element_type=jnp.float32)
    o_ref[...] = (acc + b_ref[...]).astype(o_ref.dtype)


def _kernel_tiled_batch_acc(x_ref, w_ref, b_ref, o_ref, acc_ref, *,
                            compute_dtype):
    """Large-batch path: precomputed W, grid = (B tiles, Q tiles, K tiles)."""
    k = pl.program_id(2)

    @pl.when(k == 0)
    def _():
        acc_ref[...] = jnp.zeros_like(acc_ref)

    acc_ref[...] += lax.dot_general(
        x_ref[...].astype(compute_dtype), w_ref[...].astype(compute_dtype),
        dimension_numbers=(((1,), (1,)), ((), ())),
        preferred_element_type=jnp.float32)

    @pl.when(k == pl.num_programs(2) - 1)
    def _():
        o_ref[...] = (acc_ref[...] + b_ref[...]).astype(o_ref.dtype)


# ----------------------------------------------------------------------------
# Wrapper
# ----------------------------------------------------------------------------
def _round_up(a, b):
    return (a + b - 1) // b * b


def _pad2(a, rows, cols):
    r, c = a.shape
    if r == rows and c == cols:
        return a
    return jnp.pad(a, ((0, rows - r), (0, cols - c)))


_VMEM_LIMIT = 56 * 1024 * 1024   # safe on v7x (64 MiB physical), fine elsewhere


def independent_noisy_linear(x, mu_W, sigma_W, mu_B, sigma_B, eps_W, eps_B,
                             *, tb=256, tq=512, tk=2048,
                             use_bf16_matmul=False,
                             resident_batch_limit=512):
    """Forward pass of Independent_noisy_layer.

    x:        (B, P)
    mu_W:     (Q, P)   sigma_W: (Q, P)   eps_W: (Q, P)   (fresh N(0,1))
    mu_B:     (Q,)     sigma_B: (Q,)     eps_B: (Q,)     (fresh N(0,1))
    returns:  (B, Q)
    """
    B, P = x.shape
    Q = mu_W.shape[0]
    dtype = x.dtype
    compute_dtype = jnp.bfloat16 if use_bf16_matmul else dtype

    # Dtype-aware sublane alignment (f32 -> 8, bf16 -> 16, int8/fp8 -> 32).
    itemsize = jnp.dtype(dtype).itemsize
    sub = {4: 8, 2: 16, 1: 32}.get(itemsize, 8)

    # Lane-dense tiles.
    tq = min(tq, _round_up(Q, 128))
    tk = min(tk, _round_up(P, 128))
    Qp = _round_up(Q, tq)
    Pp = _round_up(P, tk)
    n_k = Pp // tk

    # Bias precomputed once (tiny; XLA fuses to one elementwise pass).
    bias_p = _pad2((mu_B + sigma_B * eps_B).reshape(1, Q), 1, Qp)

    Bp_resident = _round_up(B, sub)
    if Bp_resident <= resident_batch_limit:
        # ---------- Resident-batch path: each weight streamed exactly once --
        Bp = Bp_resident

        # Expose >=2 parallel Q tiles for v7x's second TensorCore if possible
        # (pick the largest multiple of 128 that still divides Qp).
        if Qp // tq < 2 and Qp >= 256:
            m = Qp // 128
            for j in range(m // 2, 0, -1):
                if m % j == 0:
                    tq = 128 * j
                    break

        x_p = _pad2(x, Bp, Pp)
        mu_w_p = _pad2(mu_W, Qp, Pp)
        sig_w_p = _pad2(sigma_W, Qp, Pp)
        eps_w_p = _pad2(eps_W, Qp, Pp)

        w_spec = pl.BlockSpec((tq, tk), lambda q, k: (q, k))
        in_specs = [
            pl.BlockSpec((Bp, tk), lambda q, k: (0, k)),   # x (whole batch)
            w_spec, w_spec, w_spec,                        # mu_W, sigma_W, eps_W
            pl.BlockSpec((1, tq), lambda q, k: (0, q)),    # bias
        ]
        out_spec = pl.BlockSpec((Bp, tq), lambda q, k: (0, q))
        grid = (Qp // tq, n_k)

        if n_k == 1:
            kernel = functools.partial(_kernel_resident_batch_1k,
                                       compute_dtype=compute_dtype)
            scratch = []
        else:
            kernel = functools.partial(_kernel_resident_batch_acc,
                                       compute_dtype=compute_dtype)
            scratch = [pltpu.VMEM((Bp, tq), jnp.float32)]

        out = pl.pallas_call(
            kernel,
            out_shape=jax.ShapeDtypeStruct((Bp, Qp), dtype),
            grid_spec=pltpu.PrefetchScalarGridSpec(
                num_scalar_prefetch=0,
                grid=grid,
                in_specs=in_specs,
                out_specs=out_spec,
                scratch_shapes=scratch,
            ),
            compiler_params=pltpu.CompilerParams(
                dimension_semantics=("parallel", "arbitrary"),
                vmem_limit_bytes=_VMEM_LIMIT,
            ),
        )(x_p, mu_w_p, sig_w_p, eps_w_p, bias_p)
        return out[:B, :Q]

    # ---------- Tiled-batch path: precompute W once, single weight stream ---
    tb = min(tb, _round_up(B, sub))
    Bp = _round_up(B, tb)

    W = mu_W + sigma_W * eps_W           # one fused elementwise pass in XLA
    x_p = _pad2(x, Bp, Pp)
    w_p = _pad2(W, Qp, Pp)

    grid = (Bp // tb, Qp // tq, n_k)     # reduction axis last
    out = pl.pallas_call(
        functools.partial(_kernel_tiled_batch_acc, compute_dtype=compute_dtype),
        out_shape=jax.ShapeDtypeStruct((Bp, Qp), dtype),
        grid_spec=pltpu.PrefetchScalarGridSpec(
            num_scalar_prefetch=0,
            grid=grid,
            in_specs=[
                pl.BlockSpec((tb, tk), lambda b, q, k: (b, k)),   # x
                pl.BlockSpec((tq, tk), lambda b, q, k: (q, k)),   # W
                pl.BlockSpec((1, tq), lambda b, q, k: (0, q)),    # bias
            ],
            out_specs=pl.BlockSpec((tb, tq), lambda b, q, k: (b, q)),
            scratch_shapes=[pltpu.VMEM((tb, tq), jnp.float32)],
        ),
        compiler_params=pltpu.CompilerParams(
            dimension_semantics=("parallel", "parallel", "arbitrary"),
            vmem_limit_bytes=_VMEM_LIMIT,
        ),
    )(x_p, w_p, bias_p)
    return out[:B, :Q]


# ----------------------------------------------------------------------------
# Parameter init matching the PyTorch __init__
# ----------------------------------------------------------------------------
def init_params(key, input_p, output_q, dtype=jnp.float32):
    init_mu = math.sqrt(3.0 / input_p)
    init_sigma = 0.017
    k_w, k_b = jax.random.split(key)
    mu_W = jax.random.uniform(k_w, (output_q, input_p), dtype,
                              minval=-init_mu, maxval=init_mu)
    mu_B = jax.random.uniform(k_b, (output_q,), dtype,
                              minval=-init_mu, maxval=init_mu)
    sigma_W = jnp.full((output_q, input_p), init_sigma, dtype)
    sigma_B = jnp.full((output_q,), init_sigma, dtype)
    return mu_W, sigma_W, mu_B, sigma_B


def _reference(x, mu_W, sigma_W, mu_B, sigma_B, eps_W, eps_B):
    W = mu_W + sigma_W * eps_W
    b = mu_B + sigma_B * eps_B
    return x @ W.T + b[None, :]


def _make_case(key, batch, input_p, output_q):
    k_param, k_x, k_ew, k_eb = jax.random.split(key, 4)
    mu_W, sigma_W, mu_B, sigma_B = init_params(k_param, input_p, output_q)
    x = jax.random.normal(k_x, (batch, input_p), jnp.float32)
    # Fresh independent Gaussian noise per forward
    # (torch's self.eps_W.normal_() / self.eps_B.normal_()).
    eps_W = jax.random.normal(k_ew, (output_q, input_p), jnp.float32)
    eps_B = jax.random.normal(k_eb, (output_q,), jnp.float32)
    return x, mu_W, sigma_W, mu_B, sigma_B, eps_W, eps_B


if __name__ == "__main__":
    root = jax.random.PRNGKey(0)
    k1, k2, k3 = jax.random.split(root, 3)

    # ---- 1. Tiny NoisyNet layer (resident-batch, single-K fast path) -------
    args = _make_case(k1, batch=8, input_p=32, output_q=16)
    out = jax.block_until_ready(independent_noisy_linear(*args))
    ref = _reference(*args)
    assert out.shape == (8, 16)
    assert jnp.allclose(out, ref, atol=1e-5, rtol=1e-5), "tiny case mismatch"

    # ---- 2. Resident-batch path with a real K reduction (accumulator) ------
    args = _make_case(k2, batch=64, input_p=300, output_q=200)
    out = jax.block_until_ready(independent_noisy_linear(*args, tk=128))
    ref = _reference(*args)
    assert out.shape == (64, 200)
    assert jnp.allclose(out, ref, atol=1e-4, rtol=1e-4), "resident-acc mismatch"

    # ---- 3. Large-batch tiled path (precomputed W, single weight stream) ---
    args = _make_case(k3, batch=640, input_p=300, output_q=200)
    out = jax.block_until_ready(independent_noisy_linear(*args))
    ref = _reference(*args)
    assert out.shape == (640, 200)
    assert jnp.allclose(out, ref, atol=1e-4, rtol=1e-4), "tiled-batch mismatch"

    # ---- 4. Optional bf16 MXU path (f32 accumulate) — loose tolerance ------
    out_bf16 = jax.block_until_ready(
        independent_noisy_linear(*args, use_bf16_matmul=True))
    assert jnp.allclose(out_bf16, ref, atol=1.5e-1, rtol=1e-1), "bf16 mismatch"

    print("KERNEL_OK")
</pallas_src>

<mosaic_0001>
module attributes {stable_mosaic.version = 11 : i64} {
  func.func @_kernel_resident_batch_1k(%arg0: i32, %arg1: i32, %arg2: memref<8x128xf32, #tpu.memory_space<vmem>>, %arg3: memref<128x128xf32, #tpu.memory_space<vmem>>, %arg4: memref<128x128xf32, #tpu.memory_space<vmem>>, %arg5: memref<128x128xf32, #tpu.memory_space<vmem>>, %arg6: memref<1x128xf32, #tpu.memory_space<vmem>>, %arg7: memref<8x128xf32, #tpu.memory_space<vmem>>) attributes {dimension_semantics = [#tpu.dimension_semantics<parallel>, #tpu.dimension_semantics<arbitrary>], iteration_bounds = array<i64: 1, 1>, scalar_prefetch = 0 : i64, scratch_operands = 0 : i64, tpu.core_type = #tpu.core_type<tc>, window_params = [{transform_indices = @transform_0, window_bounds = array<i64: 8, 128>}, {transform_indices = @transform_1, window_bounds = array<i64: 128, 128>}, {transform_indices = @transform_2, window_bounds = array<i64: 128, 128>}, {transform_indices = @transform_3, window_bounds = array<i64: 128, 128>}, {transform_indices = @transform_4, window_bounds = array<i64: 1, 128>}, {transform_indices = @transform_5, window_bounds = array<i64: 8, 128>}]} {
    %c0 = arith.constant 0 : index
    %c0_0 = arith.constant 0 : index
    %0 = vector.load %arg3[%c0, %c0_0] : memref<128x128xf32, #tpu.memory_space<vmem>>, vector<128x128xf32>
    %c0_1 = arith.constant 0 : index
    %c0_2 = arith.constant 0 : index
    %1 = vector.load %arg4[%c0_1, %c0_2] : memref<128x128xf32, #tpu.memory_space<vmem>>, vector<128x128xf32>
    %c0_3 = arith.constant 0 : index
    %c0_4 = arith.constant 0 : index
    %2 = vector.load %arg5[%c0_3, %c0_4] : memref<128x128xf32, #tpu.memory_space<vmem>>, vector<128x128xf32>
    %3 = arith.mulf %1, %2 : vector<128x128xf32>
    %4 = arith.addf %0, %3 : vector<128x128xf32>
    %c0_5 = arith.constant 0 : index
    %c0_6 = arith.constant 0 : index
    %5 = vector.load %arg2[%c0_5, %c0_6] : memref<8x128xf32, #tpu.memory_space<vmem>>, vector<8x128xf32>
    %cst = arith.constant dense<0.000000e+00> : vector<8x128xf32>
    %6 = tpu.matmul %5, %4, %cst {dimension_numbers = #tpu.dot_dimension_numbers<[1], [1], [0], [0], [0, 0, 1, 0], [], []>} : vector<8x128xf32>, vector<128x128xf32>, vector<8x128xf32> -> vector<8x128xf32>
    %c0_7 = arith.constant 0 : index
    %c0_8 = arith.constant 0 : index
    %7 = vector.load %arg6[%c0_7, %c0_8] : memref<1x128xf32, #tpu.memory_space<vmem>>, vector<1x128xf32>
    %8 = vector.broadcast %7 : vector<1x128xf32> to vector<8x128xf32>
    %9 = arith.addf %6, %8 : vector<8x128xf32>
    %c0_9 = arith.constant 0 : index
    %c0_10 = arith.constant 0 : index
    %10 = vector.load %arg7[%c0_9, %c0_10] : memref<8x128xf32, #tpu.memory_space<vmem>>, vector<8x128xf32>
    tpu.vector_store %arg7[%c0_9, %c0_10], %9 {strides = array<i32>} : memref<8x128xf32, #tpu.memory_space<vmem>>, vector<8x128xf32>,
    return
  }
  func.func @transform_0(%arg0: i32, %arg1: i32) -> (i32, i32) {
    %c0_i32 = arith.constant 0 : i32
    %c0_i32_0 = arith.constant 0 : i32
    return %c0_i32, %arg1 : i32, i32
  }
  func.func @transform_1(%arg0: i32, %arg1: i32) -> (i32, i32) {
    %c0_i32 = arith.constant 0 : i32
    return %arg0, %arg1 : i32, i32
  }
  func.func @transform_2(%arg0: i32, %arg1: i32) -> (i32, i32) {
    %c0_i32 = arith.constant 0 : i32
    return %arg0, %arg1 : i32, i32
  }
  func.func @transform_3(%arg0: i32, %arg1: i32) -> (i32, i32) {
    %c0_i32 = arith.constant 0 : i32
    return %arg0, %arg1 : i32, i32
  }
  func.func @transform_4(%arg0: i32, %arg1: i32) -> (i32, i32) {
    %c0_i32 = arith.constant 0 : i32
    %c0_i32_0 = arith.constant 0 : i32
    return %c0_i32, %arg0 : i32, i32
  }
  func.func @transform_5(%arg0: i32, %arg1: i32) -> (i32, i32) {
    %c0_i32 = arith.constant 0 : i32
    %c0_i32_0 = arith.constant 0 : i32
    return %c0_i32, %arg0 : i32, i32
  }
}

</mosaic_0001>

<llo_original>
// kernel: tpu_custom_call.1
$region0: #{tpu_custom_call.1}
  #allocation0 [shape = 'u32[]', space=smem, size = 0x4, offset = 0x4, fixed_abs, tag = 'smem constant byte address 0x4 - core index']
  #allocation1 [shape = 'u32[144,128]{1,0:T(1,128)}', space=vmem, size = 0x12000, scoped, tag = 'internal scratch']
  %s0 = inlined_call_operand.hbm [shape: f32[8,128], index: 0, kind: input, shape index: {}]
  %s1 = inlined_call_operand.hbm [shape: f32[128,128], index: 1, kind: input, shape index: {}]
  %s2 = inlined_call_operand.hbm [shape: f32[128,128], index: 2, kind: input, shape index: {}]
  %s3 = inlined_call_operand.hbm [shape: f32[128,128], index: 3, kind: input, shape index: {}]
  %s4 = inlined_call_operand.vmem [shape: f32[1,128], index: 4, kind: input, shape index: {}]
  %s5 = inlined_call_operand.hbm [shape: f32[8,128], index: 5, kind: output, shape index: {}]
  %s6 = sld [smem:[#allocation0]]
  $region46: #{tpu_custom_call.1} parent=0
    _
  %s8 = ssub.s32 1, %s6
  %s9 = scalar_select 0, %s8, %s6
  $region1: #{tpu_custom_call.1} parent=0
    #allocation2 [shape = 'u8[4096]{0}', space=vmem, size = 0x1000, scoped, tag = 'input window, operand 0, single buffered']
    #allocation3 [shape = 's32[1]{0}', space=sflag, size = 0x4, scoped, tag = 'scoped memory for tpu_custom_call.1']
    #allocation4 [shape = 's32[1]{0}', space=sflag, size = 0x4, scoped, tag = 'scoped memory for tpu_custom_call.1']
    #allocation5 [shape = 'u8[65536]{0}', space=vmem, size = 0x10000, scoped, tag = 'input window, operand 1, single buffered']
    #allocation6 [shape = 's32[1]{0}', space=sflag, size = 0x4, scoped, tag = 'scoped memory for tpu_custom_call.1']
    #allocation7 [shape = 'u8[65536]{0}', space=vmem, size = 0x10000, scoped, tag = 'input window, operand 2, single buffered']
    #allocation8 [shape = 'u8[65536]{0}', space=vmem, size = 0x10000, scoped, tag = 'input window, operand 3, single buffered']
    #allocation9 [shape = 's32[1]{0}', space=sflag, size = 0x4, scoped, tag = 'scoped memory for tpu_custom_call.1']
    #allocation10 [shape = 'u8[4096]{0}', space=vmem, size = 0x1000, scoped, tag = 'output window, operand 0, single buffered']
    %10 = vsyncpa [#allocation3], 0
    %11 = vsyncpa [#allocation6], 0
    %12 = vsyncpa [#allocation9], 0
    %13 = vsyncpa [#allocation4], 0
    // Predicated region
    $region2: #{tpu_custom_call.1} parent=1 // pred_check
      _
    $region3: #{tpu_custom_call.1} parent=1 // pred_check_branch
      %15 = sbr.rel (0) target = $region5
    $region4: #{tpu_custom_call.1} parent=1 // pred_region
      %s17 = ssub.s32 128, 128
      %18 = vsyncadd [#allocation3], %s17
      %s20 = sshll.u32 [#allocation2], 4
      %s21 = int_to_ptr.vmem [resolvable:$true] %s20
      %23 = dma.hbm_to_vmem [thread:$0]  %s0, 128, %s21, [#allocation3]
    $region5: #{tpu_custom_call.1} parent=1 // pred_fallthru
      _
    // Predicated region
    $region6: #{tpu_custom_call.1} parent=1 // pred_check
      _
    $region7: #{tpu_custom_call.1} parent=1 // pred_check_branch
      %25 = sbr.rel (0) target = $region9
    $region8: #{tpu_custom_call.1} parent=1 // pred_region
      %s27 = ssub.s32 2048, 2048
      %28 = vsyncadd [#allocation6], %s27
      %s29 = sshll.u32 [#allocation5], 4
      %s30 = int_to_ptr.vmem [resolvable:$true] %s29
      %35 = dma.hbm_to_vmem [thread:$0]  %s1, 2048, %s30, [#allocation6], 128, 128, 8
    $region9: #{tpu_custom_call.1} parent=1 // pred_fallthru
      _
    // Predicated region
    $region10: #{tpu_custom_call.1} parent=1 // pred_check
      _
    $region11: #{tpu_custom_call.1} parent=1 // pred_check_branch
      %37 = sbr.rel (0) target = $region13
    $region12: #{tpu_custom_call.1} parent=1 // pred_region
      %s39 = ssub.s32 2048, 2048
      %40 = vsyncadd [#allocation6], %s39
      %s41 = sshll.u32 [#allocation7], 4
      %s42 = int_to_ptr.vmem [resolvable:$true] %s41
      %47 = dma.hbm_to_vmem [thread:$0]  %s2, 2048, %s42, [#allocation6], 128, 128, 8
    $region13: #{tpu_custom_call.1} parent=1 // pred_fallthru
      _
    // Predicated region
    $region14: #{tpu_custom_call.1} parent=1 // pred_check
      _
    $region15: #{tpu_custom_call.1} parent=1 // pred_check_branch
      %49 = sbr.rel (0) target = $region17
    $region16: #{tpu_custom_call.1} parent=1 // pred_region
      %s51 = ssub.s32 2048, 2048
      %52 = vsyncadd [#allocation9], %s51
      %s53 = sshll.u32 [#allocation8], 4
      %s54 = int_to_ptr.vmem [resolvable:$true] %s53
      %59 = dma.hbm_to_vmem [thread:$0]  %s3, 2048, %s54, [#allocation9], 128, 128, 8
    $region17: #{tpu_custom_call.1} parent=1 // pred_fallthru
      _
    // Predicated region
    $region18: #{tpu_custom_call.1} parent=1 // pred_check
      _
    $region19: #{tpu_custom_call.1} parent=1 // pred_check_branch
      %61 = sbr.rel (0) target = $region21
    $region20: #{tpu_custom_call.1} parent=1 // pred_region
      _
    $region21: #{tpu_custom_call.1} parent=1 // pred_fallthru
      _
    // Predicated region
    $region22: #{tpu_custom_call.1} parent=1 // pred_check
      _
    $region23: #{tpu_custom_call.1} parent=1 // pred_check_branch
      %63 = sbr.rel (0) target = $region25
    $region24: #{tpu_custom_call.1} parent=1 // pred_region
      %64 = dma.done [#allocation3], 128
    $region25: #{tpu_custom_call.1} parent=1 // pred_fallthru
      _
    // Predicated region
    $region26: #{tpu_custom_call.1} parent=1 // pred_check
      _
    $region27: #{tpu_custom_call.1} parent=1 // pred_check_branch
      %66 = sbr.rel (0) target = $region29
    $region28: #{tpu_custom_call.1} parent=1 // pred_region
      %67 = dma.done [#allocation6], 2048
    $region29: #{tpu_custom_call.1} parent=1 // pred_fallthru
      _
    // Predicated region
    $region30: #{tpu_custom_call.1} parent=1 // pred_check
      _
    $region31: #{tpu_custom_call.1} parent=1 // pred_check_branch
      %69 = sbr.rel (0) target = $region33
    $region32: #{tpu_custom_call.1} parent=1 // pred_region
      %70 = dma.done [#allocation6], 2048
    $region33: #{tpu_custom_call.1} parent=1 // pred_fallthru
      _
    // Predicated region
    $region34: #{tpu_custom_call.1} parent=1 // pred_check
      _
    $region35: #{tpu_custom_call.1} parent=1 // pred_check_branch
      %72 = sbr.rel (0) target = $region37
    $region36: #{tpu_custom_call.1} parent=1 // pred_region
      %73 = dma.done [#allocation9], 2048
    $region37: #{tpu_custom_call.1} parent=1 // pred_fallthru
      _
    %v74 = vld [vmem:[#allocation5] sm:$0xff]
    %v75 = vld [vmem:[#allocation5 + $0x8] sm:$0xff]
    %v76 = vld [vmem:[#allocation5 + $0x10] sm:$0xff]
    %v77 = vld [vmem:[#allocation5 + $0x18] sm:$0xff]
    %v78 = vld [vmem:[#allocation5 + $0x20] sm:$0xff]
    %v79 = vld [vmem:[#allocation5 + $0x28] sm:$0xff]
    %v80 = vld [vmem:[#allocation5 + $0x30] sm:$0xff]
    %v81 = vld [vmem:[#allocation5 + $0x38] sm:$0xff]
    %v82 = vld [vmem:[#allocation5 + $0x40] sm:$0xff]
    %v83 = vld [vmem:[#allocation5 + $0x48] sm:$0xff]
    %v84 = vld [vmem:[#allocation5 + $0x50] sm:$0xff]
    %v85 = vld [vmem:[#allocation5 + $0x58] sm:$0xff]
    %v86 = vld [vmem:[#allocation5 + $0x60] sm:$0xff]
    %v87 = vld [vmem:[#allocation5 + $0x68] sm:$0xff]
    %v88 = vld [vmem:[#allocation5 + $0x70] sm:$0xff]
    %v89 = vld [vmem:[#allocation5 + $0x78] sm:$0xff]
    %v90 = vld [vmem:[#allocation7] sm:$0xff]
    %v91 = vld [vmem:[#allocation7 + $0x8] sm:$0xff]
    %v92 = vld [vmem:[#allocation7 + $0x10] sm:$0xff]
    %v93 = vld [vmem:[#allocation7 + $0x18] sm:$0xff]
    %v94 = vld [vmem:[#allocation7 + $0x20] sm:$0xff]
    %v95 = vld [vmem:[#allocation7 + $0x28] sm:$0xff]
    %v96 = vld [vmem:[#allocation7 + $0x30] sm:$0xff]
    %v97 = vld [vmem:[#allocation7 + $0x38] sm:$0xff]
    %v98 = vld [vmem:[#allocation7 + $0x40] sm:$0xff]
    %v99 = vld [vmem:[#allocation7 + $0x48] sm:$0xff]
    %v100 = vld [vmem:[#allocation7 + $0x50] sm:$0xff]
    %v101 = vld [vmem:[#allocation7 + $0x58] sm:$0xff]
    %v102 = vld [vmem:[#allocation7 + $0x60] sm:$0xff]
    %v103 = vld [vmem:[#allocation7 + $0x68] sm:$0xff]
    %v104 = vld [vmem:[#allocation7 + $0x70] sm:$0xff]
    %v105 = vld [vmem:[#allocation7 + $0x78] sm:$0xff]
    %v106 = vld [vmem:[#allocation8] sm:$0xff]
    %v107 = vld [vmem:[#allocation8 + $0x8] sm:$0xff]
    %v108 = vld [vmem:[#allocation8 + $0x10] sm:$0xff]
    %v109 = vld [vmem:[#allocation8 + $0x18] sm:$0xff]
    %v110 = vld [vmem:[#allocation8 + $0x20] sm:$0xff]
    %v111 = vld [vmem:[#allocation8 + $0x28] sm:$0xff]
    %v112 = vld [vmem:[#allocation8 + $0x30] sm:$0xff]
    %v113 = vld [vmem:[#allocation8 + $0x38] sm:$0xff]
    %v114 = vld [vmem:[#allocation8 + $0x40] sm:$0xff]
    %v115 = vld [vmem:[#allocation8 + $0x48] sm:$0xff]
    %v116 = vld [vmem:[#allocation8 + $0x50] sm:$0xff]
    %v117 = vld [vmem:[#allocation8 + $0x58] sm:$0xff]
    %v118 = vld [vmem:[#allocation8 + $0x60] sm:$0xff]
    %v119 = vld [vmem:[#allocation8 + $0x68] sm:$0xff]
    %v120 = vld [vmem:[#allocation8 + $0x70] sm:$0xff]
    %v121 = vld [vmem:[#allocation8 + $0x78] sm:$0xff]
    %v122 = vmul.f32 %v90, %v106
    %v123 = vmul.f32 %v91, %v107
    %v124 = vmul.f32 %v92, %v108
    %v125 = vmul.f32 %v93, %v109
    %v126 = vmul.f32 %v94, %v110
    %v127 = vmul.f32 %v95, %v111
    %v128 = vmul.f32 %v96, %v112
    %v129 = vmul.f32 %v97, %v113
    %v130 = vmul.f32 %v98, %v114
    %v131 = vmul.f32 %v99, %v115
    %v132 = vmul.f32 %v100, %v116
    %v133 = vmul.f32 %v101, %v117
    %v134 = vmul.f32 %v102, %v118
    %v135 = vmul.f32 %v103, %v119
    %v136 = vmul.f32 %v104, %v120
    %v137 = vmul.f32 %v105, %v121
    %v138 = vadd.f32 %v74, %v122
    %v139 = vadd.f32 %v75, %v123
    %v140 = vadd.f32 %v76, %v124
    %v141 = vadd.f32 %v77, %v125
    %v142 = vadd.f32 %v78, %v126
    %v143 = vadd.f32 %v79, %v127
    %v144 = vadd.f32 %v80, %v128
    %v145 = vadd.f32 %v81, %v129
    %v146 = vadd.f32 %v82, %v130
    %v147 = vadd.f32 %v83, %v131
    %v148 = vadd.f32 %v84, %v132
    %v149 = vadd.f32 %v85, %v133
    %v150 = vadd.f32 %v86, %v134
    %v151 = vadd.f32 %v87, %v135
    %v152 = vadd.f32 %v88, %v136
    %v153 = vadd.f32 %v89, %v137
    %v154 = vld [vmem:[#allocation2] sm:$0xff]
    %v155 = vld [vmem:[%s4] sm:$0x1]
    %v157 = vlaneseq
    %v158 = vshrl.u32 %v157, 7
    %v159 = vsub.s32 0, %v158
    %v160 = vrot.slane %v155, %v159
    %162 = vmatprep.subr.mxu0 0.0
    %163 = vmatpush1.xpose.msra.mxu0 %v153
    %164 = vmatprep.subr.mxu0 0.0
    %165 = vmatpush1.xpose.msra.mxu0 %v152
    %166 = vmatprep.subr.mxu0 0.0
    %167 = vmatpush1.xpose.msra.mxu0 %v151
    %168 = vmatprep.subr.mxu0 0.0
    %169 = vmatpush1.xpose.msra.mxu0 %v150
    %170 = vmatprep.subr.mxu0 0.0
    %171 = vmatpush1.xpose.msra.mxu0 %v149
    %172 = vmatprep.subr.mxu0 0.0
    %173 = vmatpush1.xpose.msra.mxu0 %v148
    %174 = vmatprep.subr.mxu0 0.0
    %175 = vmatpush1.xpose.msra.mxu0 %v147
    %176 = vmatprep.subr.mxu0 0.0
    %177 = vmatpush1.xpose.msra.mxu0 %v146
    %178 = vmatprep.subr.mxu0 0.0
    %179 = vmatpush1.xpose.msra.mxu0 %v145
    %180 = vmatprep.subr.mxu0 0.0
    %181 = vmatpush1.xpose.msra.mxu0 %v144
    %182 = vmatprep.subr.mxu0 0.0
    %183 = vmatpush1.xpose.msra.mxu0 %v143
    %184 = vmatprep.subr.mxu0 0.0
    %185 = vmatpush1.xpose.msra.mxu0 %v142
    %186 = vmatprep.subr.mxu0 0.0
    %187 = vmatpush1.xpose.msra.mxu0 %v141
    %188 = vmatprep.subr.mxu0 0.0
    %189 = vmatpush1.xpose.msra.mxu0 %v140
    %190 = vmatprep.subr.mxu0 0.0
    %191 = vmatpush1.xpose.msra.mxu0 %v139
    %192 = vmatprep.subr.mxu0 0.0
    %193 = vmatpush1.xpose.msra.mxu0 %v138
    %194 = vmatprep.subr.mxu0 0.0
    %195 = vmatpush2.xpose.msra.mxu0 0.0
    %196 = vmatprep.subr.mxu0 0.0
    %197 = vmatpush2.xpose.msra.mxu0 0.0
    %198 = vmatprep.subr.mxu0 0.0
    %199 = vmatpush2.xpose.msra.mxu0 0.0
    %200 = vmatprep.subr.mxu0 0.0
    %201 = vmatpush2.xpose.msra.mxu0 0.0
    %202 = vmatprep.subr.mxu0 0.0
    %203 = vmatpush2.xpose.msra.mxu0 0.0
    %204 = vmatprep.subr.mxu0 0.0
    %205 = vmatpush2.xpose.msra.mxu0 0.0
    %206 = vmatprep.subr.mxu0 0.0
    %207 = vmatpush2.xpose.msra.mxu0 0.0
    %208 = vmatprep.subr.mxu0 0.0
    %209 = vmatpush2.xpose.msra.mxu0 0.0
    %210 = vmatprep.subr.mxu0 0.0
    %211 = vmatpush2.xpose.msra.mxu0 0.0
    %212 = vmatprep.subr.mxu0 0.0
    %213 = vmatpush2.xpose.msra.mxu0 0.0
    %214 = vmatprep.subr.mxu0 0.0
    %215 = vmatpush2.xpose.msra.mxu0 0.0
    %216 = vmatprep.subr.mxu0 0.0
    %217 = vmatpush2.xpose.msra.mxu0 0.0
    %218 = vmatprep.subr.mxu0 0.0
    %219 = vmatpush2.xpose.msra.mxu0 0.0
    %220 = vmatprep.subr.mxu0 0.0
    %221 = vmatpush2.xpose.msra.mxu0 0.0
    %222 = vmatprep.subr.mxu0 0.0
    %223 = vmatpush2.xpose.msra.mxu0 0.0
    %224 = vmatprep.subr.mxu0 0.0
    %225 = vmatpush2.xpose.msra.mxu0 0.0
    %226 = vmatprep.mubr.f32.mxu0 0.0
    %227 = vmatmul.mubr.f32.gmra.mxu0 %v154
    %v228 = vpop.f32.mrf.mxu0
    %v229 = vadd.f32 %v160, %v228
    %v230 = vpop.f32.mrf.mxu0
    %231 = vdwg.mxu0
    %232 = vst [vmem:[#allocation10] sm:$0xff] %v229
    // Predicated region
    $region38: #{tpu_custom_call.1} parent=1 // pred_check
      _
    $region39: #{tpu_custom_call.1} parent=1 // pred_check_branch
      %234 = sbr.rel (0) target = $region41
    $region40: #{tpu_custom_call.1} parent=1 // pred_region
      %s236 = ssub.s32 128, 128
      %237 = vsyncadd [#allocation4], %s236
      %s239 = sshll.u32 [#allocation10], 4
      %s240 = int_to_ptr.vmem [resolvable:$true] %s239
      %242 = dma.vmem_to_hbm [thread:$0]  %s240, 128, %s5, [#allocation4]
    $region41: #{tpu_custom_call.1} parent=1 // pred_fallthru
      _
    // Predicated region
    $region42: #{tpu_custom_call.1} parent=1 // pred_check
      _
    $region43: #{tpu_custom_call.1} parent=1 // pred_check_branch
      %244 = sbr.rel (0) target = $region45
    $region44: #{tpu_custom_call.1} parent=1 // pred_region
      %245 = dma.done [#allocation4], 128
    $region45: #{tpu_custom_call.1} parent=1 // pred_fallthru
      _
    %246 = vsyncpa [#allocation3], 1
    %247 = vsyncpa [#allocation6], 1
    %248 = vsyncpa [#allocation9], 1
    %249 = vsyncpa [#allocation4], 1

</llo_original>
